<compile_context>
chip_gen: v5e
topology: v5e:2x2
jax: 0.10.0
libtpu: 0.0.40
codegen_flags: <defaults>
</compile_context>

<pallas_src>
import functools

import jax
import jax.numpy as jnp
from jax.experimental import pallas as pl
from jax.experimental.pallas import tpu as pltpu


def _round_up(x, m):
    return ((x + m - 1) // m) * m


def _tpu_kind():
    try:
        return jax.devices()[0].device_kind.lower()
    except Exception:
        return ""


def _vqvae_kernel(m_valid, tm, d,
                  x_ref, weT_ref, be_ref, cbm2_ref, c2_ref, cbhl_ref, wdT_ref, bd_ref,
                  xrec_ref, xl_ref, commit_ref, fit_ref):
    i = pl.program_id(0)

    # ----- encoder: pointwise Conv1d == (D, CinP) @ (CinP, TM) + b  (tiny f32 contraction) --
    x = x_ref[...]                                                    # (CinP, TM) f32
    x_e = jnp.dot(weT_ref[...], x,
                  preferred_element_type=jnp.float32) + be_ref[...]   # (D, TM) f32

    # ----- VQ distances: ||c||^2 - 2 c.x  (||x||^2 folded out of the (K,TM) tensor) --------
    # (-2*codebook) is pre-scaled & bf16-cast in the wrapper -> single bf16 MXU matmul and no
    # (K,TM)-sized "*2" / "+x2" VPU passes.
    dots = jnp.dot(cbm2_ref[...], x_e.astype(jnp.bfloat16),
                   preferred_element_type=jnp.float32)                # (K, TM) = -2 c.x
    dp = c2_ref[...] + dots                                           # (K, TM) = dist - ||x||^2

    k = dp.shape[0]
    min_dp = jnp.min(dp, axis=0, keepdims=True)                       # (1, TM)
    # first index achieving the minimum (torch argmin tie-break).  f32 iota/min keeps to
    # well-supported lowerings; exact for K < 2^24.
    iota_f = jax.lax.broadcasted_iota(jnp.int32, dp.shape, 0).astype(jnp.float32)
    idx_f = jnp.min(jnp.where(dp <= min_dp, iota_f, float(k)),
                    axis=0, keepdims=True)                            # (1, TM)
    onehot = (iota_f == idx_f).astype(jnp.bfloat16)                   # (K, TM), 0/1 exact

    # ----- dequantise: stacked hi/lo bf16 codebook -> one 128-row MXU pass, f32 accumulate --
    xd2 = jnp.dot(cbhl_ref[...], onehot,
                  preferred_element_type=jnp.float32)                 # (2D, TM)
    x_d = xd2[:d, :] + xd2[d:, :]                                     # (D, TM) ~exact lookup

    # ----- per-column validity mask (last tile may contain padded columns) ------------------
    cols = i * tm + jax.lax.broadcasted_iota(jnp.int32, (1, tm), 1)   # (1, TM)
    valid = (cols < m_valid).astype(jnp.float32)

    x2 = jnp.sum(x_e * x_e, axis=0, keepdims=True)                    # (1, TM)
    fit_ref[...] = (min_dp + x2) * valid                              # min-distance partials
    diff = x_d - x_e                                                  # commit stays ~exact f32
    commit_ref[...] = jnp.sum(diff * diff, axis=0, keepdims=True) * valid
    xl_ref[...] = idx_f.astype(jnp.int32)

    # straight-through: x_e + sg(x_d - x_e) == x_d numerically in the forward pass
    # ----- decoder: pointwise Conv1d == (CinP, D) @ (D, TM) + b -----------------------------
    xrec_ref[...] = jnp.dot(wdT_ref[...], x_d,
                            preferred_element_type=jnp.float32) + bd_ref[...]


def vqvae_forward(x_nct, params, *, tm_override=None):
    """x_nct: (N, C, T) float32. Returns (x_rec (N,C,T), commit_loss, metric, x_l (N,T))."""
    B, Cin, T = x_nct.shape
    M = B * T
    we, be, cb, wd, bd = (params["we"], params["be"], params["codebook"],
                          params["wd"], params["bd"])
    K, D = cb.shape

    kind = _tpu_kind()
    big_vmem = ("v5" in kind) or ("v6" in kind)   # 128 MiB physical; v7x / unknown: be safe
    is_v7 = "v7" in kind

    # Per-tile live set is dominated by a few (K, TM)-sized temporaries (dots, dp, iota,
    # onehot) plus the (2D, TM) activations; pick TM so that stays well inside the scoped
    # VMEM budget for the current generation.
    if tm_override is not None:
        tm_max = tm_override
    elif K >= 2048:
        tm_max = 512 if big_vmem else 256
    elif K >= 1024:
        tm_max = 1024 if big_vmem else 512
    elif K >= 512:
        tm_max = 1024
    else:
        tm_max = 2048 if big_vmem else 1024
    TM = max(128, min(tm_max, _round_up(M, 128)))
    if is_v7:
        # both v7x TensorCores only get work if the ("parallel",) grid has >= 2 steps
        TM = max(128, min(TM, _round_up(-(-M // 2), 128)))
    M_pad = _round_up(M, TM)
    G = M_pad // TM
    vmem_limit = (96 if big_vmem else 32) * 1024 * 1024

    CinP = _round_up(Cin, 8)   # fill whole (8,128) vregs -> unmasked x / xrec tile stores

    # rows-on-lanes layout: (N, C, T) -> (C, N*T); pad rows to CinP and columns to M_pad
    x_cm = jnp.transpose(x_nct, (1, 0, 2)).reshape(Cin, M).astype(jnp.float32)
    x_cm = jnp.pad(x_cm, ((0, CinP - Cin), (0, M_pad - M)))

    # codebook-constant precompute, hoisted out of the kernel
    cb_f = cb.astype(jnp.float32)
    cb_m2 = (-2.0 * cb_f).astype(jnp.bfloat16)                   # (K, D)   exact *(-2) scaling
    c2 = jnp.sum(cb_f * cb_f, axis=1, keepdims=True)             # (K, 1)   f32
    cb_hi = cb_f.astype(jnp.bfloat16)                            # hi/lo split for dequantise
    cb_lo = (cb_f - cb_hi.astype(jnp.float32)).astype(jnp.bfloat16)
    cb_hilo_T = jnp.concatenate([jnp.transpose(cb_hi),
                                 jnp.transpose(cb_lo)], axis=0)  # (2D, K)  bf16

    weT = jnp.pad(jnp.transpose(we).astype(jnp.float32),
                  ((0, 0), (0, CinP - Cin)))                     # (D, CinP)
    beC = jnp.reshape(be, (D, 1)).astype(jnp.float32)            # (D, 1)
    wdT = jnp.pad(jnp.transpose(wd).astype(jnp.float32),
                  ((0, CinP - Cin), (0, 0)))                     # (CinP, D)
    bdC = jnp.pad(jnp.reshape(bd, (Cin, 1)).astype(jnp.float32),
                  ((0, CinP - Cin), (0, 0)))                     # (CinP, 1)

    const = lambda shape: pl.BlockSpec(shape, lambda i: (0, 0))  # VMEM-resident weights
    row_tile = lambda rows: pl.BlockSpec((rows, TM), lambda i: (0, i))

    kernel = functools.partial(_vqvae_kernel, M, TM, D)

    xrec_cm, xl, commit_p, fit_p = pl.pallas_call(
        kernel,
        grid=(G,),
        in_specs=[
            row_tile(CinP),       # x tile (CinP, TM)
            const((D, CinP)),     # encoder weight (transposed, padded)
            const((D, 1)),        # encoder bias (column)
            const((K, D)),        # -2 * codebook, bf16, distance matmul
            const((K, 1)),        # precomputed ||codebook||^2, f32
            const((2 * D, K)),    # [cb_hi^T ; cb_lo^T], bf16, dequantise matmul
            const((CinP, D)),     # decoder weight (transposed, padded)
            const((CinP, 1)),     # decoder bias (column)
        ],
        out_specs=[
            row_tile(CinP),       # reconstruction tile (CinP, TM)   -- lane-dense
            row_tile(1),          # code indices (1, TM)             -- lane-dense
            row_tile(1),          # per-column commit partial sums   -- lane-dense
            row_tile(1),          # per-column min-distance partials -- lane-dense
        ],
        out_shape=(
            jax.ShapeDtypeStruct((CinP, M_pad), jnp.float32),
            jax.ShapeDtypeStruct((1, M_pad), jnp.int32),
            jax.ShapeDtypeStruct((1, M_pad), jnp.float32),
            jax.ShapeDtypeStruct((1, M_pad), jnp.float32),
        ),
        compiler_params=pltpu.CompilerParams(
            dimension_semantics=("parallel",),   # independent tiles -> megacore on v7x
            vmem_limit_bytes=vmem_limit),
    )(x_cm, weT, beC, cb_m2, c2, cb_hilo_T, wdT, bdC)

    # wrapper-side reductions of the lane-dense partials (padded columns contribute 0)
    commit_loss = jnp.sum(commit_p) / (M * D)
    metric = jnp.sum(fit_p) / M

    x_rec = jnp.transpose(xrec_cm[:Cin, :M].reshape(Cin, B, T), (1, 0, 2))   # back to (N,C,T)
    x_l = xl[0, :M].reshape(B, T)
    return x_rec, commit_loss, metric, x_l


def init_params(key, c_in, emb_width, codebook_size):
    k1, k2, k3, k4, k5 = jax.random.split(key, 5)
    return {
        "we": jax.random.normal(k1, (c_in, emb_width), jnp.float32) * 0.1,
        "be": jax.random.normal(k2, (1, emb_width), jnp.float32) * 0.01,
        "codebook": jax.random.normal(k3, (codebook_size, emb_width), jnp.float32) * 0.1,
        "wd": jax.random.normal(k4, (emb_width, c_in), jnp.float32) * 0.1,
        "bd": jax.random.normal(k5, (1, c_in), jnp.float32) * 0.01,
    }


def _reference_check(x_nct, params, x_rec, commit_loss, metric, x_l):
    """Pure-JAX reference. Uses the kernel's code assignment (verified near-optimal) so the
    check is insensitive to bf16 near-tie argmin flips."""
    B, Cin, T = x_nct.shape
    M = B * T
    we, be, cb, wd, bd = (params["we"], params["be"], params["codebook"],
                          params["wd"], params["bd"])
    xf = jnp.transpose(x_nct, (0, 2, 1)).reshape(M, Cin).astype(jnp.float32)
    x_e = xf @ we + be                                                       # (M, D)
    d = (jnp.sum(x_e * x_e, axis=1, keepdims=True)
         - 2.0 * (x_e @ cb.T) + jnp.sum(cb * cb, axis=1)[None, :])           # (M, K)
    idx = x_l.reshape(M)
    picked = jnp.take_along_axis(d, idx[:, None], axis=1)[:, 0]
    # loose bound: bf16 distance matmul can flip near-ties within ~1e-2 absolute
    assert bool(jnp.all(picked <= jnp.min(d, axis=1) + 3e-2)), "non-optimal code picked"
    x_d = cb[idx]                                                            # exact lookup
    xrec_ref = jnp.transpose((x_d @ wd + bd).reshape(B, T, Cin), (0, 2, 1))
    assert bool(jnp.allclose(x_rec, xrec_ref, atol=1e-4, rtol=1e-4)), "x_rec mismatch"
    commit_ref = jnp.mean((x_d - x_e) ** 2)
    assert bool(jnp.allclose(commit_loss, commit_ref, atol=1e-5, rtol=1e-3)), "commit mismatch"
    fit_ref = jnp.mean(jnp.min(d, axis=1))
    assert bool(jnp.allclose(metric, fit_ref, atol=1e-2, rtol=1e-2)), "metric mismatch"


if __name__ == "__main__":
    key = jax.random.PRNGKey(0)
    kx, kp = jax.random.split(key)

    B, C, T = 2, 4, 16          # (bs, dimension, frame_length)
    EMB, KBINS = 64, 64          # BottleneckBlock(codebook_size=64, emb_width=64, mu=0.99)

    x = jax.random.normal(kx, (B, C, T), jnp.float32)
    params = init_params(kp, C, EMB, KBINS)

    x_rec, commit_loss, metric, x_l = jax.block_until_ready(vqvae_forward(x, params))

    assert x_rec.shape == (B, C, T)
    assert x_l.shape == (B, T)
    assert commit_loss.shape == () and metric.shape == ()
    assert bool(jnp.all(jnp.isfinite(x_rec)))
    _reference_check(x, params, x_rec, commit_loss, metric, x_l)
    print("KERNEL_OK")
</pallas_src>

<mosaic_0001>
module attributes {stable_mosaic.version = 11 : i64} {
  func.func @_vqvae_kernel(%arg0: i32, %arg1: memref<8x128xf32, #tpu.memory_space<vmem>>, %arg2: memref<64x8xf32, #tpu.memory_space<vmem>>, %arg3: memref<64x1xf32, #tpu.memory_space<vmem>>, %arg4: memref<64x64xbf16, #tpu.memory_space<vmem>>, %arg5: memref<64x1xf32, #tpu.memory_space<vmem>>, %arg6: memref<128x64xbf16, #tpu.memory_space<vmem>>, %arg7: memref<8x64xf32, #tpu.memory_space<vmem>>, %arg8: memref<8x1xf32, #tpu.memory_space<vmem>>, %arg9: memref<8x128xf32, #tpu.memory_space<vmem>>, %arg10: memref<1x128xi32, #tpu.memory_space<vmem>>, %arg11: memref<1x128xf32, #tpu.memory_space<vmem>>, %arg12: memref<1x128xf32, #tpu.memory_space<vmem>>) attributes {dimension_semantics = [#tpu.dimension_semantics<parallel>], iteration_bounds = array<i64: 1>, scalar_prefetch = 0 : i64, scratch_operands = 0 : i64, tpu.core_type = #tpu.core_type<tc>, window_params = [{transform_indices = @transform_0, window_bounds = array<i64: 8, 128>}, {pipeline_mode = #tpu.pipeline_mode<synchronous>, transform_indices = @transform_1, window_bounds = array<i64: 64, 8>}, {pipeline_mode = #tpu.pipeline_mode<synchronous>, transform_indices = @transform_2, window_bounds = array<i64: 64, 1>}, {pipeline_mode = #tpu.pipeline_mode<synchronous>, transform_indices = @transform_3, window_bounds = array<i64: 64, 64>}, {pipeline_mode = #tpu.pipeline_mode<synchronous>, transform_indices = @transform_4, window_bounds = array<i64: 64, 1>}, {pipeline_mode = #tpu.pipeline_mode<synchronous>, transform_indices = @transform_5, window_bounds = array<i64: 128, 64>}, {pipeline_mode = #tpu.pipeline_mode<synchronous>, transform_indices = @transform_6, window_bounds = array<i64: 8, 64>}, {pipeline_mode = #tpu.pipeline_mode<synchronous>, transform_indices = @transform_7, window_bounds = array<i64: 8, 1>}, {transform_indices = @transform_8, window_bounds = array<i64: 8, 128>}, {transform_indices = @transform_9, window_bounds = array<i64: 1, 128>}, {transform_indices = @transform_10, window_bounds = array<i64: 1, 128>}, {transform_indices = @transform_11, window_bounds = array<i64: 1, 128>}]} {
    %c0 = arith.constant 0 : index
    %c0_0 = arith.constant 0 : index
    %0 = vector.load %arg1[%c0, %c0_0] : memref<8x128xf32, #tpu.memory_space<vmem>>, vector<8x128xf32>
    %c0_1 = arith.constant 0 : index
    %c0_2 = arith.constant 0 : index
    %1 = vector.load %arg2[%c0_1, %c0_2] : memref<64x8xf32, #tpu.memory_space<vmem>>, vector<64x8xf32>
    %cst = arith.constant dense<0.000000e+00> : vector<64x128xf32>
    %2 = tpu.matmul %1, %0, %cst {dimension_numbers = #tpu.dot_dimension_numbers<[1], [0], [0], [1], [0, 0, 1, 1], [], []>} : vector<64x8xf32>, vector<8x128xf32>, vector<64x128xf32> -> vector<64x128xf32>
    %c0_3 = arith.constant 0 : index
    %c0_4 = arith.constant 0 : index
    %3 = vector.load %arg3[%c0_3, %c0_4] : memref<64x1xf32, #tpu.memory_space<vmem>>, vector<64x1xf32>
    %4 = vector.broadcast %3 : vector<64x1xf32> to vector<64x128xf32>
    %5 = arith.addf %2, %4 : vector<64x128xf32>
    %c0_5 = arith.constant 0 : index
    %c0_6 = arith.constant 0 : index
    %6 = vector.load %arg4[%c0_5, %c0_6] : memref<64x64xbf16, #tpu.memory_space<vmem>>, vector<64x64xbf16>
    %7 = arith.truncf %5 : vector<64x128xf32> to vector<64x128xbf16>
    %cst_7 = arith.constant dense<0.000000e+00> : vector<64x128xf32>
    %8 = tpu.matmul %6, %7, %cst_7 {dimension_numbers = #tpu.dot_dimension_numbers<[1], [0], [0], [1], [0, 0, 1, 1], [], []>} : vector<64x64xbf16>, vector<64x128xbf16>, vector<64x128xf32> -> vector<64x128xf32>
    %c0_8 = arith.constant 0 : index
    %c0_9 = arith.constant 0 : index
    %9 = vector.load %arg5[%c0_8, %c0_9] : memref<64x1xf32, #tpu.memory_space<vmem>>, vector<64x1xf32>
    %10 = vector.broadcast %9 : vector<64x1xf32> to vector<64x128xf32>
    %11 = arith.addf %10, %8 : vector<64x128xf32>
    %cst_10 = arith.constant dense<0x7F800000> : vector<128xf32>
    %12 = vector.multi_reduction <minimumf>, %11, %cst_10 [0] : vector<64x128xf32> to vector<128xf32>
    %13 = vector.shape_cast %12 : vector<128xf32> to vector<1x128xf32>
    %14 = tpu.iota {dimensions = array<i32: 0>} : vector<64x128xi32>
    %15 = arith.sitofp %14 : vector<64x128xi32> to vector<64x128xf32>
    %16 = vector.broadcast %13 : vector<1x128xf32> to vector<64x128xf32>
    %17 = arith.cmpf ole, %11, %16 : vector<64x128xf32>
    %cst_11 = arith.constant 6.400000e+01 : f32
    %18 = vector.broadcast %cst_11 : f32 to vector<64x128xf32>
    %19 = arith.select %17, %15, %18 : vector<64x128xi1>, vector<64x128xf32>
    %cst_12 = arith.constant dense<0x7F800000> : vector<128xf32>
    %20 = vector.multi_reduction <minimumf>, %19, %cst_12 [0] : vector<64x128xf32> to vector<128xf32>
    %21 = vector.shape_cast %20 : vector<128xf32> to vector<1x128xf32>
    %22 = vector.broadcast %21 : vector<1x128xf32> to vector<64x128xf32>
    %23 = arith.cmpf oeq, %15, %22 : vector<64x128xf32>
    %24 = arith.extui %23 : vector<64x128xi1> to vector<64x128xi32>
    %25 = arith.sitofp %24 : vector<64x128xi32> to vector<64x128xf32>
    %26 = arith.truncf %25 : vector<64x128xf32> to vector<64x128xbf16>
    %c0_13 = arith.constant 0 : index
    %c0_14 = arith.constant 0 : index
    %27 = vector.load %arg6[%c0_13, %c0_14] : memref<128x64xbf16, #tpu.memory_space<vmem>>, vector<128x64xbf16>
    %cst_15 = arith.constant dense<0.000000e+00> : vector<128x128xf32>
    %28 = tpu.matmul %27, %26, %cst_15 {dimension_numbers = #tpu.dot_dimension_numbers<[1], [0], [0], [1], [0, 0, 1, 1], [], []>} : vector<128x64xbf16>, vector<64x128xbf16>, vector<128x128xf32> -> vector<128x128xf32>
    %29 = vector.extract_strided_slice %28 {offsets = [0, 0], sizes = [64, 128], strides = [1, 1]} : vector<128x128xf32> to vector<64x128xf32>
    %30 = vector.extract_strided_slice %28 {offsets = [64, 0], sizes = [64, 128], strides = [1, 1]} : vector<128x128xf32> to vector<64x128xf32>
    %31 = arith.addf %29, %30 : vector<64x128xf32>
    %c128_i32 = arith.constant 128 : i32
    %32 = arith.muli %arg0, %c128_i32 : i32
    %33 = tpu.iota {dimensions = array<i32: 1>} : vector<1x128xi32>
    %34 = vector.broadcast %32 : i32 to vector<1x128xi32>
    %35 = arith.addi %34, %33 : vector<1x128xi32>
    %c32_i32 = arith.constant 32 : i32
    %36 = vector.broadcast %c32_i32 : i32 to vector<1x128xi32>
    %37 = arith.cmpi slt, %35, %36 : vector<1x128xi32>
    %38 = arith.extui %37 : vector<1x128xi1> to vector<1x128xi32>
    %39 = arith.sitofp %38 : vector<1x128xi32> to vector<1x128xf32>
    %40 = arith.mulf %5, %5 : vector<64x128xf32>
    %cst_16 = arith.constant dense<0.000000e+00> : vector<128xf32>
    %41 = vector.multi_reduction <add>, %40, %cst_16 [0] : vector<64x128xf32> to vector<128xf32>
    %42 = vector.shape_cast %41 : vector<128xf32> to vector<1x128xf32>
    %43 = arith.addf %13, %42 : vector<1x128xf32>
    %44 = arith.mulf %43, %39 : vector<1x128xf32>
    %c0_17 = arith.constant 0 : index
    %c0_18 = arith.constant 0 : index
    %45 = vector.load %arg12[%c0_17, %c0_18] : memref<1x128xf32, #tpu.memory_space<vmem>>, vector<1x128xf32>
    tpu.vector_store %arg12[%c0_17, %c0_18], %44 {strides = array<i32>} : memref<1x128xf32, #tpu.memory_space<vmem>>, vector<1x128xf32>,
    %46 = arith.subf %31, %5 : vector<64x128xf32>
    %47 = arith.mulf %46, %46 : vector<64x128xf32>
    %cst_19 = arith.constant dense<0.000000e+00> : vector<128xf32>
    %48 = vector.multi_reduction <add>, %47, %cst_19 [0] : vector<64x128xf32> to vector<128xf32>
    %49 = vector.shape_cast %48 : vector<128xf32> to vector<1x128xf32>
    %50 = arith.mulf %49, %39 : vector<1x128xf32>
    %c0_20 = arith.constant 0 : index
    %c0_21 = arith.constant 0 : index
    %51 = vector.load %arg11[%c0_20, %c0_21] : memref<1x128xf32, #tpu.memory_space<vmem>>, vector<1x128xf32>
    tpu.vector_store %arg11[%c0_20, %c0_21], %50 {strides = array<i32>} : memref<1x128xf32, #tpu.memory_space<vmem>>, vector<1x128xf32>,
    %52 = arith.fptosi %21 : vector<1x128xf32> to vector<1x128xi32>
    %c0_22 = arith.constant 0 : index
    %c0_23 = arith.constant 0 : index
    %53 = vector.load %arg10[%c0_22, %c0_23] : memref<1x128xi32, #tpu.memory_space<vmem>>, vector<1x128xi32>
    tpu.vector_store %arg10[%c0_22, %c0_23], %52 {strides = array<i32>} : memref<1x128xi32, #tpu.memory_space<vmem>>, vector<1x128xi32>,
    %c0_24 = arith.constant 0 : index
    %c0_25 = arith.constant 0 : index
    %54 = vector.load %arg7[%c0_24, %c0_25] : memref<8x64xf32, #tpu.memory_space<vmem>>, vector<8x64xf32>
    %cst_26 = arith.constant dense<0.000000e+00> : vector<8x128xf32>
    %55 = tpu.matmul %54, %31, %cst_26 {dimension_numbers = #tpu.dot_dimension_numbers<[1], [0], [0], [1], [0, 0, 1, 1], [], []>} : vector<8x64xf32>, vector<64x128xf32>, vector<8x128xf32> -> vector<8x128xf32>
    %c0_27 = arith.constant 0 : index
    %c0_28 = arith.constant 0 : index
    %56 = vector.load %arg8[%c0_27, %c0_28] : memref<8x1xf32, #tpu.memory_space<vmem>>, vector<8x1xf32>
    %57 = vector.broadcast %56 : vector<8x1xf32> to vector<8x128xf32>
    %58 = arith.addf %55, %57 : vector<8x128xf32>
    %c0_29 = arith.constant 0 : index
    %c0_30 = arith.constant 0 : index
    %59 = vector.load %arg9[%c0_29, %c0_30] : memref<8x128xf32, #tpu.memory_space<vmem>>, vector<8x128xf32>
    tpu.vector_store %arg9[%c0_29, %c0_30], %58 {strides = array<i32>} : memref<8x128xf32, #tpu.memory_space<vmem>>, vector<8x128xf32>,
    return
  }
  func.func @transform_0(%arg0: i32) -> (i32, i32) {
    %c0_i32 = arith.constant 0 : i32
    %c0_i32_0 = arith.constant 0 : i32
    return %c0_i32, %arg0 : i32, i32
  }
  func.func @transform_1(%arg0: i32) -> (i32, i32) {
    %c0_i32 = arith.constant 0 : i32
    %c0_i32_0 = arith.constant 0 : i32
    %c0_i32_1 = arith.constant 0 : i32
    return %c0_i32, %c0_i32_0 : i32, i32
  }
  func.func @transform_2(%arg0: i32) -> (i32, i32) {
    %c0_i32 = arith.constant 0 : i32
    %c0_i32_0 = arith.constant 0 : i32
    %c0_i32_1 = arith.constant 0 : i32
    return %c0_i32, %c0_i32_0 : i32, i32
  }
  func.func @transform_3(%arg0: i32) -> (i32, i32) {
    %c0_i32 = arith.constant 0 : i32
    %c0_i32_0 = arith.constant 0 : i32
    %c0_i32_1 = arith.constant 0 : i32
    return %c0_i32, %c0_i32_0 : i32, i32
  }
  func.func @transform_4(%arg0: i32) -> (i32, i32) {
    %c0_i32 = arith.constant 0 : i32
    %c0_i32_0 = arith.constant 0 : i32
    %c0_i32_1 = arith.constant 0 : i32
    return %c0_i32, %c0_i32_0 : i32, i32
  }
  func.func @transform_5(%arg0: i32) -> (i32, i32) {
    %c0_i32 = arith.constant 0 : i32
    %c0_i32_0 = arith.constant 0 : i32
    %c0_i32_1 = arith.constant 0 : i32
    return %c0_i32, %c0_i32_0 : i32, i32
  }
  func.func @transform_6(%arg0: i32) -> (i32, i32) {
    %c0_i32 = arith.constant 0 : i32
    %c0_i32_0 = arith.constant 0 : i32
    %c0_i32_1 = arith.constant 0 : i32
    return %c0_i32, %c0_i32_0 : i32, i32
  }
  func.func @transform_7(%arg0: i32) -> (i32, i32) {
    %c0_i32 = arith.constant 0 : i32
    %c0_i32_0 = arith.constant 0 : i32
    %c0_i32_1 = arith.constant 0 : i32
    return %c0_i32, %c0_i32_0 : i32, i32
  }
  func.func @transform_8(%arg0: i32) -> (i32, i32) {
    %c0_i32 = arith.constant 0 : i32
    %c0_i32_0 = arith.constant 0 : i32
    return %c0_i32, %arg0 : i32, i32
  }
  func.func @transform_9(%arg0: i32) -> (i32, i32) {
    %c0_i32 = arith.constant 0 : i32
    %c0_i32_0 = arith.constant 0 : i32
    return %c0_i32, %arg0 : i32, i32
  }
  func.func @transform_10(%arg0: i32) -> (i32, i32) {
    %c0_i32 = arith.constant 0 : i32
    %c0_i32_0 = arith.constant 0 : i32
    return %c0_i32, %arg0 : i32, i32
  }
  func.func @transform_11(%arg0: i32) -> (i32, i32) {
    %c0_i32 = arith.constant 0 : i32
    %c0_i32_0 = arith.constant 0 : i32
    return %c0_i32, %arg0 : i32, i32
  }
}

</mosaic_0001>

<llo_original>
// kernel: tpu_custom_call.1
$region0: #{tpu_custom_call.1}
  #allocation0 [shape = 'u32[]', space=smem, size = 0x4, offset = 0x4, fixed_abs, tag = 'smem constant byte address 0x4 - core index']
  #allocation1 [shape = 'u32[72,128]{1,0:T(1,128)}', space=vmem, size = 0x9000, scoped, tag = 'internal scratch']
  %s0 = inlined_call_operand.vmem [shape: f32[8,128], index: 0, kind: input, shape index: {}]
  %s1 = inlined_call_operand.vmem [shape: f32[64,8], index: 1, kind: input, shape index: {}]
  %s2 = inlined_call_operand.vmem [shape: f32[64,1], index: 2, kind: input, shape index: {}]
  %s3 = inlined_call_operand.vmem [shape: bf16[64,64], index: 3, kind: input, shape index: {}]
  %s4 = inlined_call_operand.vmem [shape: f32[64,1], index: 4, kind: input, shape index: {}]
  %s5 = inlined_call_operand.vmem [shape: bf16[128,64], index: 5, kind: input, shape index: {}]
  %s6 = inlined_call_operand.vmem [shape: f32[8,64], index: 6, kind: input, shape index: {}]
  %s7 = inlined_call_operand.vmem [shape: f32[8,1], index: 7, kind: input, shape index: {}]
  %s8 = inlined_call_operand.hbm [shape: f32[8,128], index: 8, kind: output, shape index: {0}]
  %s9 = inlined_call_operand.hbm [shape: s32[1,128], index: 9, kind: output, shape index: {1}]
  %s10 = inlined_call_operand.hbm [shape: f32[1,128], index: 10, kind: output, shape index: {2}]
  %s11 = inlined_call_operand.hbm [shape: f32[1,128], index: 11, kind: output, shape index: {3}]
  %12 = xla_tuple %s8, %s9, %s10, %s11
  %s13 = sld [smem:[#allocation0]]
  $region66: #{tpu_custom_call.1} parent=0
    _
  %s15 = ssub.s32 1, %s13
  %s16 = scalar_select 0, %s15, %s13
  $region1: #{tpu_custom_call.1} parent=0
    #allocation2 [shape = 'u8[4096]{0}', space=vmem, size = 0x1000, scoped, tag = 'output window, operand 0, single buffered']
    #allocation3 [shape = 's32[1]{0}', space=sflag, size = 0x4, scoped, tag = 'scoped memory for tpu_custom_call.1']
    #allocation4 [shape = 'u8[512]{0}', space=vmem, size = 0x400, scoped, tag = 'output window, operand 1, single buffered']
    #allocation5 [shape = 's32[1]{0}', space=sflag, size = 0x4, scoped, tag = 'scoped memory for tpu_custom_call.1']
    #allocation6 [shape = 'u8[512]{0}', space=vmem, size = 0x400, scoped, tag = 'output window, operand 2, single buffered']
    #allocation7 [shape = 'u8[512]{0}', space=vmem, size = 0x400, scoped, tag = 'output window, operand 3, single buffered']
    #allocation8 [shape = 's32[1]{0}', space=sflag, size = 0x4, scoped, tag = 'scoped memory for tpu_custom_call.1']
    %17 = vsyncpa [#allocation3], 0
    %18 = vsyncpa [#allocation5], 0
    %19 = vsyncpa [#allocation8], 0
    // Predicated region
    $region2: #{tpu_custom_call.1} parent=1 // pred_check
      _
    $region3: #{tpu_custom_call.1} parent=1 // pred_check_branch
      %21 = sbr.rel (0) target = $region5
    $region4: #{tpu_custom_call.1} parent=1 // pred_region
      _
    $region5: #{tpu_custom_call.1} parent=1 // pred_fallthru
      _
    // Predicated region
    $region6: #{tpu_custom_call.1} parent=1 // pred_check
      _
    $region7: #{tpu_custom_call.1} parent=1 // pred_check_branch
      %23 = sbr.rel (0) target = $region9
    $region8: #{tpu_custom_call.1} parent=1 // pred_region
      _
    $region9: #{tpu_custom_call.1} parent=1 // pred_fallthru
      _
    // Predicated region
    $region10: #{tpu_custom_call.1} parent=1 // pred_check
      _
    $region11: #{tpu_custom_call.1} parent=1 // pred_check_branch
      %25 = sbr.rel (0) target = $region13
    $region12: #{tpu_custom_call.1} parent=1 // pred_region
      _
    $region13: #{tpu_custom_call.1} parent=1 // pred_fallthru
      _
    // Predicated region
    $region14: #{tpu_custom_call.1} parent=1 // pred_check
      _
    $region15: #{tpu_custom_call.1} parent=1 // pred_check_branch
      %27 = sbr.rel (0) target = $region17
    $region16: #{tpu_custom_call.1} parent=1 // pred_region
      _
    $region17: #{tpu_custom_call.1} parent=1 // pred_fallthru
      _
    // Predicated region
    $region18: #{tpu_custom_call.1} parent=1 // pred_check
      _
    $region19: #{tpu_custom_call.1} parent=1 // pred_check_branch
      %29 = sbr.rel (0) target = $region21
    $region20: #{tpu_custom_call.1} parent=1 // pred_region
      _
    $region21: #{tpu_custom_call.1} parent=1 // pred_fallthru
      _
    // Predicated region
    $region22: #{tpu_custom_call.1} parent=1 // pred_check
      _
    $region23: #{tpu_custom_call.1} parent=1 // pred_check_branch
      %31 = sbr.rel (0) target = $region25
    $region24: #{tpu_custom_call.1} parent=1 // pred_region
      _
    $region25: #{tpu_custom_call.1} parent=1 // pred_fallthru
      _
    // Predicated region
    $region26: #{tpu_custom_call.1} parent=1 // pred_check
      _
    $region27: #{tpu_custom_call.1} parent=1 // pred_check_branch
      %33 = sbr.rel (0) target = $region29
    $region28: #{tpu_custom_call.1} parent=1 // pred_region
      _
    $region29: #{tpu_custom_call.1} parent=1 // pred_fallthru
      _
    // Predicated region
    $region30: #{tpu_custom_call.1} parent=1 // pred_check
      _
    $region31: #{tpu_custom_call.1} parent=1 // pred_check_branch
      %35 = sbr.rel (0) target = $region33
    $region32: #{tpu_custom_call.1} parent=1 // pred_region
      _
    $region33: #{tpu_custom_call.1} parent=1 // pred_fallthru
      _
    %v37 = vld [vmem:[%s0] sm:$0xff]
    %v38 = vld [vmem:[%s1] sm:$0xff]
    %v39 = vld [vmem:[%s1 + $0x8] sm:$0xff]
    %v40 = vld [vmem:[%s1 + $0x10] sm:$0xff]
    %v41 = vld [vmem:[%s1 + $0x18] sm:$0xff]
    %v42 = vld [vmem:[%s1 + $0x20] sm:$0xff]
    %v43 = vld [vmem:[%s1 + $0x28] sm:$0xff]
    %v44 = vld [vmem:[%s1 + $0x30] sm:$0xff]
    %v45 = vld [vmem:[%s1 + $0x38] sm:$0xff]
    %v46 = vld [vmem:[%s2] sm:$0xff]
    %v47 = vld [vmem:[%s2 + $0x8] sm:$0xff]
    %v48 = vld [vmem:[%s2 + $0x10] sm:$0xff]
    %v49 = vld [vmem:[%s2 + $0x18] sm:$0xff]
    %v50 = vld [vmem:[%s2 + $0x20] sm:$0xff]
    %v51 = vld [vmem:[%s2 + $0x28] sm:$0xff]
    %v52 = vld [vmem:[%s2 + $0x30] sm:$0xff]
    %v53 = vld [vmem:[%s2 + $0x38] sm:$0xff]
    %55 = vset.pattern.permute.xlu0 0
    %56 = vperm.xlu0 %55, %v46
    %v57 = vpop.permute.xlu0 %56
    %60 = vset.pattern.permute.xlu0 0
    %61 = vperm.xlu0 %60, %v47
    %v62 = vpop.permute.xlu0 %61
    %65 = vset.pattern.permute.xlu0 0
    %66 = vperm.xlu0 %65, %v48
    %v67 = vpop.permute.xlu0 %66
    %70 = vset.pattern.permute.xlu0 0
    %71 = vperm.xlu0 %70, %v49
    %v72 = vpop.permute.xlu0 %71
    %75 = vset.pattern.permute.xlu0 0
    %76 = vperm.xlu0 %75, %v50
    %v77 = vpop.permute.xlu0 %76
    %80 = vset.pattern.permute.xlu0 0
    %81 = vperm.xlu0 %80, %v51
    %v82 = vpop.permute.xlu0 %81
    %85 = vset.pattern.permute.xlu0 0
    %86 = vperm.xlu0 %85, %v52
    %v87 = vpop.permute.xlu0 %86
    %90 = vset.pattern.permute.xlu0 0
    %91 = vperm.xlu0 %90, %v53
    %v92 = vpop.permute.xlu0 %91
    %vm94 = vcmask 64512
    %v96 = vsel %vm94, %v38, 0
    %v99 = vsel %vm94, %v39, 0
    %v102 = vsel %vm94, %v40, 0
    %v105 = vsel %vm94, %v41, 0
    %v108 = vsel %vm94, %v42, 0
    %v111 = vsel %vm94, %v43, 0
    %v114 = vsel %vm94, %v44, 0
    %v117 = vsel %vm94, %v45, 0
    %119 = vmatpush.msra.mxu0 0.0
    %120 = vmatpush.msra.mxu0 0.0
    %121 = vmatpush.msra.mxu0 0.0
    %122 = vmatpush.msra.mxu0 0.0
    %123 = vmatpush.msra.mxu0 0.0
    %124 = vmatpush.msra.mxu0 0.0
    %125 = vmatpush.msra.mxu0 0.0
    %126 = vmatpush.msra.mxu0 0.0
    %127 = vmatpush.msra.mxu0 0.0
    %128 = vmatpush.msra.mxu0 0.0
    %129 = vmatpush.msra.mxu0 0.0
    %130 = vmatpush.msra.mxu0 0.0
    %131 = vmatpush.msra.mxu0 0.0
    %132 = vmatpush.msra.mxu0 0.0
    %133 = vmatpush.msra.mxu0 0.0
    %134 = vmatpush.msra.mxu0 %v37
    %135 = vmatmul.f32.gmra.mxu0 %v96
    %v136 = vpop.f32.mrf.mxu0
    %v137 = vadd.f32 %v57, %v136
    %138 = vmatmul.f32.gmra.mxu0 %v99
    %v139 = vpop.f32.mrf.mxu0
    %v140 = vadd.f32 %v62, %v139
    %141 = vmatmul.f32.gmra.mxu0 %v102
    %v142 = vpop.f32.mrf.mxu0
    %v143 = vadd.f32 %v67, %v142
    %144 = vmatmul.f32.gmra.mxu0 %v105
    %v145 = vpop.f32.mrf.mxu0
    %v146 = vadd.f32 %v72, %v145
    %147 = vmatmul.f32.gmra.mxu0 %v108
    %v148 = vpop.f32.mrf.mxu0
    %v149 = vadd.f32 %v77, %v148
    %150 = vmatmul.f32.gmra.mxu0 %v111
    %v151 = vpop.f32.mrf.mxu0
    %v152 = vadd.f32 %v82, %v151
    %153 = vmatmul.f32.gmra.mxu0 %v114
    %v154 = vpop.f32.mrf.mxu0
    %v155 = vadd.f32 %v87, %v154
    %156 = vmatmul.f32.gmra.mxu0 %v117
    %v157 = vpop.f32.mrf.mxu0
    %v158 = vadd.f32 %v92, %v157
    %159 = vdwg.mxu0
    %v160 = vld [vmem:[%s3] sm:$0xf]
    %v161 = vld [vmem:[%s3 + $0x4] sm:$0xf]
    %v162 = vld [vmem:[%s3 + $0x8] sm:$0xf]
    %v163 = vld [vmem:[%s3 + $0xc] sm:$0xf]
    %v164 = vld [vmem:[%s3 + $0x10] sm:$0xf]
    %v165 = vld [vmem:[%s3 + $0x14] sm:$0xf]
    %v166 = vld [vmem:[%s3 + $0x18] sm:$0xf]
    %v167 = vld [vmem:[%s3 + $0x1c] sm:$0xf]
    %v168 = vpack.c.bf16 %v140, %v137
    %v169 = vpack.c.bf16 %v146, %v143
    %v170 = vpack.c.bf16 %v152, %v149
    %v171 = vpack.c.bf16 %v158, %v155
    %v180 = vunpack.c.l.b16 %v160
    %v181 = vunpack.c.l.b16 %v161
    %v182 = vunpack.c.l.b16 %v162
    %v183 = vunpack.c.l.b16 %v163
    %v184 = vunpack.c.l.b16 %v164
    %v185 = vunpack.c.l.b16 %v165
    %v186 = vunpack.c.l.b16 %v166
    %v187 = vunpack.c.l.b16 %v167
    %v188 = vpack.c.b16 %v181, %v180
    %v189 = vpack.c.b16 %v183, %v182
    %v190 = vpack.c.b16 %v185, %v184
    %v191 = vpack.c.b16 %v187, %v186
    %vm192 = vcmask 523264
    %v194 = vsel %vm192, %v188, 0
    %v197 = vsel %vm192, %v189, 0
    %v200 = vsel %vm192, %v190, 0
    %v203 = vsel %vm192, %v191, 0
    %205 = vmatpush.bf16.msra.mxu0 0
    %206 = vmatpush.bf16.msra.mxu0 0
    %207 = vmatpush.bf16.msra.mxu0 0
    %208 = vmatpush.bf16.msra.mxu0 0
    %209 = vmatpush.bf16.msra.mxu0 %v171
    %210 = vmatpush.bf16.msra.mxu0 %v170
    %211 = vmatpush.bf16.msra.mxu0 %v169
    %212 = vmatpush.bf16.msra.mxu0 %v168
    %213 = vmatmul.bf16.gmra.mxu0 %v194
    %v214 = vpop.f32.mrf.mxu0
    %v215 = vadd.f32 0.0, %v214
    %v216 = vpop.f32.mrf.mxu0
    %v217 = vadd.f32 0.0, %v216
    %218 = vmatmul.bf16.gmra.mxu0 %v197
    %v219 = vpop.f32.mrf.mxu0
    %v220 = vadd.f32 0.0, %v219
    %v221 = vpop.f32.mrf.mxu0
    %v222 = vadd.f32 0.0, %v221
    %223 = vmatmul.bf16.gmra.mxu0 %v200
    %v224 = vpop.f32.mrf.mxu0
    %v225 = vadd.f32 0.0, %v224
    %v226 = vpop.f32.mrf.mxu0
    %v227 = vadd.f32 0.0, %v226
    %228 = vmatmul.bf16.gmra.mxu0 %v203
    %v229 = vpop.f32.mrf.mxu0
    %v230 = vadd.f32 0.0, %v229
    %v231 = vpop.f32.mrf.mxu0
    %v232 = vadd.f32 0.0, %v231
    %233 = vdwg.mxu0
    %v234 = vld [vmem:[%s4] sm:$0xff]
    %v235 = vld [vmem:[%s4 + $0x8] sm:$0xff]
    %v236 = vld [vmem:[%s4 + $0x10] sm:$0xff]
    %v237 = vld [vmem:[%s4 + $0x18] sm:$0xff]
    %v238 = vld [vmem:[%s4 + $0x20] sm:$0xff]
    %v239 = vld [vmem:[%s4 + $0x28] sm:$0xff]
    %v240 = vld [vmem:[%s4 + $0x30] sm:$0xff]
    %v241 = vld [vmem:[%s4 + $0x38] sm:$0xff]
    %243 = vset.pattern.permute.xlu0 0
    %244 = vperm.xlu0 %243, %v234
    %v245 = vpop.permute.xlu0 %244
    %248 = vset.pattern.permute.xlu0 0
    %249 = vperm.xlu0 %248, %v235
    %v250 = vpop.permute.xlu0 %249
    %253 = vset.pattern.permute.xlu0 0
    %254 = vperm.xlu0 %253, %v236
    %v255 = vpop.permute.xlu0 %254
    %258 = vset.pattern.permute.xlu0 0
    %259 = vperm.xlu0 %258, %v237
    %v260 = vpop.permute.xlu0 %259
    %263 = vset.pattern.permute.xlu0 0
    %264 = vperm.xlu0 %263, %v238
    %v265 = vpop.permute.xlu0 %264
    %268 = vset.pattern.permute.xlu0 0
    %269 = vperm.xlu0 %268, %v239
    %v270 = vpop.permute.xlu0 %269
    %273 = vset.pattern.permute.xlu0 0
    %274 = vperm.xlu0 %273, %v240
    %v275 = vpop.permute.xlu0 %274
    %278 = vset.pattern.permute.xlu0 0
    %279 = vperm.xlu0 %278, %v241
    %v280 = vpop.permute.xlu0 %279
    %v282 = vadd.f32 %v245, %v215
    %v283 = vadd.f32 %v250, %v217
    %v284 = vadd.f32 %v255, %v220
    %v285 = vadd.f32 %v260, %v222
    %v286 = vadd.f32 %v265, %v225
    %v287 = vadd.f32 %v270, %v227
    %v288 = vadd.f32 %v275, %v230
    %v289 = vadd.f32 %v280, %v232
    %v290 = vmin.f32 %v282, %v286
    %v291 = vmin.f32 %v283, %v287
    %v292 = vmin.f32 %v284, %v288
    %v293 = vmin.f32 %v285, %v289
    %v294 = vmin.f32 %v290, %v291
    %v295 = vmin.f32 %v292, %v293
    %v296 = vmin.f32 %v294, %v295
    %v297 = vrot.slane %v296, 4
    %v298 = vmin.f32 %v296, %v297
    %v299 = vrot.slane %v298, 2
    %v300 = vmin.f32 %v298, %v299
    %v301 = vrot.slane %v300, 1
    %v302 = vmin.f32 %v300, %v301
    %v303 = vlaneseq
    %v304 = vshrl.u32 %v303, 7
    %v305 = vadd.s32 %v304, 8
    %v306 = vadd.s32 %v304, 16
    %v307 = vadd.s32 %v304, 24
    %v308 = vadd.s32 %v304, 32
    %v309 = vadd.s32 %v304, 40
    %v310 = vadd.s32 %v304, 48
    %v311 = vadd.s32 %v304, 56
    %v312 = vcvt.s32.f32 %v304
    %v313 = vcvt.s32.f32 %v305
    %v314 = vcvt.s32.f32 %v306
    %v315 = vcvt.s32.f32 %v307
    %v316 = vcvt.s32.f32 %v308
    %v317 = vcvt.s32.f32 %v309
    %v318 = vcvt.s32.f32 %v310
    %v319 = vcvt.s32.f32 %v311
    %vm320 = vcmp.le.f32.partialorder %v282, %v302
    %vm321 = vcmp.le.f32.partialorder %v283, %v302
    %vm322 = vcmp.le.f32.partialorder %v284, %v302
    %vm323 = vcmp.le.f32.partialorder %v285, %v302
    %vm324 = vcmp.le.f32.partialorder %v286, %v302
    %vm325 = vcmp.le.f32.partialorder %v287, %v302
    %vm326 = vcmp.le.f32.partialorder %v288, %v302
    %vm327 = vcmp.le.f32.partialorder %v289, %v302
    %v328 = vsel %vm320, %v312, 64.0
    %v329 = vsel %vm321, %v313, 64.0
    %v330 = vsel %vm322, %v314, 64.0
    %v331 = vsel %vm323, %v315, 64.0
    %v332 = vsel %vm324, %v316, 64.0
    %v333 = vsel %vm325, %v317, 64.0
    %v334 = vsel %vm326, %v318, 64.0
    %v335 = vsel %vm327, %v319, 64.0
    %v336 = vmin.f32 %v328, %v332
    %v337 = vmin.f32 %v329, %v333
    %v338 = vmin.f32 %v330, %v334
    %v339 = vmin.f32 %v331, %v335
    %v340 = vmin.f32 %v336, %v337
    %v341 = vmin.f32 %v338, %v339
    %v342 = vmin.f32 %v340, %v341
    %v343 = vrot.slane %v342, 4
    %v344 = vmin.f32 %v342, %v343
    %v345 = vrot.slane %v344, 2
    %v346 = vmin.f32 %v344, %v345
    %v347 = vrot.slane %v346, 1
    %v348 = vmin.f32 %v346, %v347
    %vm349 = vcmp.eq.f32.partialorder %v312, %v348
    %vm350 = vcmp.eq.f32.partialorder %v313, %v348
    %vm351 = vcmp.eq.f32.partialorder %v314, %v348
    %vm352 = vcmp.eq.f32.partialorder %v315, %v348
    %vm353 = vcmp.eq.f32.partialorder %v316, %v348
    %vm354 = vcmp.eq.f32.partialorder %v317, %v348
    %vm355 = vcmp.eq.f32.partialorder %v318, %v348
    %vm356 = vcmp.eq.f32.partialorder %v319, %v348
    %v357 = vsel %vm349, 1, 0
    %v358 = vsel %vm350, 1, 0
    %v359 = vsel %vm351, 1, 0
    %v360 = vsel %vm352, 1, 0
    %v361 = vsel %vm353, 1, 0
    %v362 = vsel %vm354, 1, 0
    %v363 = vsel %vm355, 1, 0
    %v364 = vsel %vm356, 1, 0
    %v365 = vcvt.s32.f32 %v357
    %v366 = vcvt.s32.f32 %v358
    %v367 = vcvt.s32.f32 %v359
    %v368 = vcvt.s32.f32 %v360
    %v369 = vcvt.s32.f32 %v361
    %v370 = vcvt.s32.f32 %v362
    %v371 = vcvt.s32.f32 %v363
    %v372 = vcvt.s32.f32 %v364
    %v373 = vpack.c.bf16 %v366, %v365
    %v374 = vpack.c.bf16 %v368, %v367
    %v375 = vpack.c.bf16 %v370, %v369
    %v376 = vpack.c.bf16 %v372, %v371
    %v377 = vld [vmem:[%s5] sm:$0xf]
    %v378 = vld [vmem:[%s5 + $0x4] sm:$0xf]
    %v379 = vld [vmem:[%s5 + $0x8] sm:$0xf]
    %v380 = vld [vmem:[%s5 + $0xc] sm:$0xf]
    %v381 = vld [vmem:[%s5 + $0x10] sm:$0xf]
    %v382 = vld [vmem:[%s5 + $0x14] sm:$0xf]
    %v383 = vld [vmem:[%s5 + $0x18] sm:$0xf]
    %v384 = vld [vmem:[%s5 + $0x1c] sm:$0xf]
    %v385 = vld [vmem:[%s5 + $0x20] sm:$0xf]
    %v386 = vld [vmem:[%s5 + $0x24] sm:$0xf]
    %v387 = vld [vmem:[%s5 + $0x28] sm:$0xf]
    %v388 = vld [vmem:[%s5 + $0x2c] sm:$0xf]
    %v389 = vld [vmem:[%s5 + $0x30] sm:$0xf]
    %v390 = vld [vmem:[%s5 + $0x34] sm:$0xf]
    %v391 = vld [vmem:[%s5 + $0x38] sm:$0xf]
    %v392 = vld [vmem:[%s5 + $0x3c] sm:$0xf]
    %v409 = vunpack.c.l.b16 %v377
    %v410 = vunpack.c.l.b16 %v378
    %v411 = vunpack.c.l.b16 %v379
    %v412 = vunpack.c.l.b16 %v380
    %v413 = vunpack.c.l.b16 %v381
    %v414 = vunpack.c.l.b16 %v382
    %v415 = vunpack.c.l.b16 %v383
    %v416 = vunpack.c.l.b16 %v384
    %v417 = vunpack.c.l.b16 %v385
    %v418 = vunpack.c.l.b16 %v386
    %v419 = vunpack.c.l.b16 %v387
    %v420 = vunpack.c.l.b16 %v388
    %v421 = vunpack.c.l.b16 %v389
    %v422 = vunpack.c.l.b16 %v390
    %v423 = vunpack.c.l.b16 %v391
    %v424 = vunpack.c.l.b16 %v392
    %v425 = vpack.c.b16 %v410, %v409
    %v426 = vpack.c.b16 %v412, %v411
    %v427 = vpack.c.b16 %v414, %v413
    %v428 = vpack.c.b16 %v416, %v415
    %v429 = vpack.c.b16 %v418, %v417
    %v430 = vpack.c.b16 %v420, %v419
    %v431 = vpack.c.b16 %v422, %v421
    %v432 = vpack.c.b16 %v424, %v423
    %v434 = vsel %vm192, %v425, 0
    %v437 = vsel %vm192, %v426, 0
    %v440 = vsel %vm192, %v427, 0
    %v443 = vsel %vm192, %v428, 0
    %v446 = vsel %vm192, %v429, 0
    %v449 = vsel %vm192, %v430, 0
    %v452 = vsel %vm192, %v431, 0
    %v455 = vsel %vm192, %v432, 0
    %457 = vmatpush.bf16.msra.mxu0 0
    %458 = vmatpush.bf16.msra.mxu0 0
    %459 = vmatpush.bf16.msra.mxu0 0
    %460 = vmatpush.bf16.msra.mxu0 0
    %461 = vmatpush.bf16.msra.mxu0 %v376
    %462 = vmatpush.bf16.msra.mxu0 %v375
    %463 = vmatpush.bf16.msra.mxu0 %v374
    %464 = vmatpush.bf16.msra.mxu0 %v373
    %465 = vmatmul.bf16.gmra.mxu0 %v434
    %v466 = vpop.f32.mrf.mxu0
    %v467 = vadd.f32 0.0, %v466
    %v468 = vpop.f32.mrf.mxu0
    %v469 = vadd.f32 0.0, %v468
    %470 = vmatmul.bf16.gmra.mxu0 %v437
    %v471 = vpop.f32.mrf.mxu0
    %v472 = vadd.f32 0.0, %v471
    %v473 = vpop.f32.mrf.mxu0
    %v474 = vadd.f32 0.0, %v473
    %475 = vmatmul.bf16.gmra.mxu0 %v440
    %v476 = vpop.f32.mrf.mxu0
    %v477 = vadd.f32 0.0, %v476
    %v478 = vpop.f32.mrf.mxu0
    %v479 = vadd.f32 0.0, %v478
    %480 = vmatmul.bf16.gmra.mxu0 %v443
    %v481 = vpop.f32.mrf.mxu0
    %v482 = vadd.f32 0.0, %v481
    %v483 = vpop.f32.mrf.mxu0
    %v484 = vadd.f32 0.0, %v483
    %485 = vmatmul.bf16.gmra.mxu0 %v446
    %v486 = vpop.f32.mrf.mxu0
    %v487 = vadd.f32 0.0, %v486
    %v488 = vpop.f32.mrf.mxu0
    %v489 = vadd.f32 0.0, %v488
    %490 = vmatmul.bf16.gmra.mxu0 %v449
    %v491 = vpop.f32.mrf.mxu0
    %v492 = vadd.f32 0.0, %v491
    %v493 = vpop.f32.mrf.mxu0
    %v494 = vadd.f32 0.0, %v493
    %495 = vmatmul.bf16.gmra.mxu0 %v452
    %v496 = vpop.f32.mrf.mxu0
    %v497 = vadd.f32 0.0, %v496
    %v498 = vpop.f32.mrf.mxu0
    %v499 = vadd.f32 0.0, %v498
    %500 = vmatmul.bf16.gmra.mxu0 %v455
    %v501 = vpop.f32.mrf.mxu0
    %v502 = vadd.f32 0.0, %v501
    %v503 = vpop.f32.mrf.mxu0
    %v504 = vadd.f32 0.0, %v503
    %505 = vdwg.mxu0
    %v506 = vadd.f32 %v467, %v487
    %v507 = vadd.f32 %v469, %v489
    %v508 = vadd.f32 %v472, %v492
    %v509 = vadd.f32 %v474, %v494
    %v510 = vadd.f32 %v477, %v497
    %v511 = vadd.f32 %v479, %v499
    %v512 = vadd.f32 %v482, %v502
    %v513 = vadd.f32 %v484, %v504
    %s514 = smul.u32 0, 128
    %v515 = vlaneseq
    %v516 = vand.u32 %v515, 127
    %v517 = vstv %s514
    %v518 = vadd.s32 %v517, %v516
    %vm519 = vcmp.lt.s32.totalorder %v518, 32
    %v520 = vsel %vm519, 1, 0
    %v521 = vcvt.s32.f32 %v520
    %v522 = vmul.f32 %v137, %v137
    %v523 = vmul.f32 %v140, %v140
    %v524 = vmul.f32 %v143, %v143
    %v525 = vmul.f32 %v146, %v146
    %v526 = vmul.f32 %v149, %v149
    %v527 = vmul.f32 %v152, %v152
    %v528 = vmul.f32 %v155, %v155
    %v529 = vmul.f32 %v158, %v158
    %v530 = vadd.f32 %v522, %v523
    %v531 = vadd.f32 %v530, %v524
    %v532 = vadd.f32 %v531, %v525
    %v533 = vadd.f32 %v532, %v526
    %v534 = vadd.f32 %v533, %v527
    %v535 = vadd.f32 %v534, %v528
    %v536 = vadd.f32 %v535, %v529
    %v537 = vrot.slane %v536, 4
    %v538 = vadd.f32 %v536, %v537
    %v539 = vrot.slane %v538, 2
    %v540 = vadd.f32 %v538, %v539
    %v541 = vrot.slane %v540, 1
    %v542 = vadd.f32 %v540, %v541
    %v543 = vadd.f32 %v302, %v542
    %v544 = vmul.f32 %v543, %v521
    %545 = vst [vmem:[#allocation7] sm:$0x1] %v544
    %v546 = vsub.f32 %v506, %v137
    %v547 = vsub.f32 %v507, %v140
    %v548 = vsub.f32 %v508, %v143
    %v549 = vsub.f32 %v509, %v146
    %v550 = vsub.f32 %v510, %v149
    %v551 = vsub.f32 %v511, %v152
    %v552 = vsub.f32 %v512, %v155
    %v553 = vsub.f32 %v513, %v158
    %v554 = vmul.f32 %v546, %v546
    %v555 = vmul.f32 %v547, %v547
    %v556 = vmul.f32 %v548, %v548
    %v557 = vmul.f32 %v549, %v549
    %v558 = vmul.f32 %v550, %v550
    %v559 = vmul.f32 %v551, %v551
    %v560 = vmul.f32 %v552, %v552
    %v561 = vmul.f32 %v553, %v553
    %v562 = vadd.f32 %v554, %v555
    %v563 = vadd.f32 %v562, %v556
    %v564 = vadd.f32 %v563, %v557
    %v565 = vadd.f32 %v564, %v558
    %v566 = vadd.f32 %v565, %v559
    %v567 = vadd.f32 %v566, %v560
    %v568 = vadd.f32 %v567, %v561
    %v569 = vrot.slane %v568, 4
    %v570 = vadd.f32 %v568, %v569
    %v571 = vrot.slane %v570, 2
    %v572 = vadd.f32 %v570, %v571
    %v573 = vrot.slane %v572, 1
    %v574 = vadd.f32 %v572, %v573
    %v575 = vmul.f32 %v574, %v521
    %576 = vst [vmem:[#allocation6] sm:$0x1] %v575
    %v577 = vcvt.f32.s32.to.zero.pseudo %v348
    %578 = vst [vmem:[#allocation4] sm:$0x1] %v577
    %v579 = vld [vmem:[%s6] sm:$0xff]
    %v580 = vld [vmem:[%s7] sm:$0xff]
    %582 = vset.pattern.permute.xlu0 0
    %583 = vperm.xlu0 %582, %v580
    %v584 = vpop.permute.xlu0 %583
    %v587 = vsel %vm192, %v579, 0
    %589 = vmatpush.msra.mxu0 0.0
    %590 = vmatpush.msra.mxu0 0.0
    %591 = vmatpush.msra.mxu0 0.0
    %592 = vmatpush.msra.mxu0 0.0
    %593 = vmatpush.msra.mxu0 0.0
    %594 = vmatpush.msra.mxu0 0.0
    %595 = vmatpush.msra.mxu0 0.0
    %596 = vmatpush.msra.mxu0 0.0
    %597 = vmatpush.msra.mxu0 %v513
    %598 = vmatpush.msra.mxu0 %v512
    %599 = vmatpush.msra.mxu0 %v511
    %600 = vmatpush.msra.mxu0 %v510
    %601 = vmatpush.msra.mxu0 %v509
    %602 = vmatpush.msra.mxu0 %v508
    %603 = vmatpush.msra.mxu0 %v507
    %604 = vmatpush.msra.mxu0 %v506
    %605 = vmatmul.f32.gmra.mxu0 %v587
    %v606 = vpop.f32.mrf.mxu0
    %v607 = vadd.f32 %v584, %v606
    %608 = vdwg.mxu0
    %609 = vst [vmem:[#allocation2] sm:$0xff] %v607
    // Predicated region
    $region34: #{tpu_custom_call.1} parent=1 // pred_check
      _
    $region35: #{tpu_custom_call.1} parent=1 // pred_check_branch
      %611 = sbr.rel (0) target = $region37
    $region36: #{tpu_custom_call.1} parent=1 // pred_region
      %613 = vsyncadd [#allocation3], 0
      %s615 = sshll.u32 [#allocation2], 4
      %s616 = int_to_ptr.vmem [resolvable:$true] %s615
      %s617 = sshll.u32 %s8, 4
      %s618 = int_to_ptr.hbm [resolvable:$true] %s617
      %620 = dma.vmem_to_hbm [thread:$0]  %s616, 128, %s618, [#allocation3]
    $region37: #{tpu_custom_call.1} parent=1 // pred_fallthru
      _
    // Predicated region
    $region38: #{tpu_custom_call.1} parent=1 // pred_check
      _
    $region39: #{tpu_custom_call.1} parent=1 // pred_check_branch
      %622 = sbr.rel (0) target = $region41
    $region40: #{tpu_custom_call.1} parent=1 // pred_region
      %624 = vsyncadd [#allocation5], 0
      %s626 = sshll.u32 [#allocation4], 4
      %s627 = int_to_ptr.vmem [resolvable:$true] %s626
      %s628 = sshll.u32 %s9, 4
      %s629 = int_to_ptr.hbm [resolvable:$true] %s628
      %631 = dma.vmem_to_hbm [thread:$0]  %s627, 16, %s629, [#allocation5]
    $region41: #{tpu_custom_call.1} parent=1 // pred_fallthru
      _
    // Predicated region
    $region42: #{tpu_custom_call.1} parent=1 // pred_check
      _
    $region43: #{tpu_custom_call.1} parent=1 // pred_check_branch
      %633 = sbr.rel (0) target = $region45
    $region44: #{tpu_custom_call.1} parent=1 // pred_region
      %635 = vsyncadd [#allocation5], 0
      %s637 = sshll.u32 [#allocation6], 4
      %s638 = int_to_ptr.vmem [resolvable:$true] %s637
      %s639 = sshll.u32 %s10, 4
      %s640 = int_to_ptr.hbm [resolvable:$true] %s639
      %642 = dma.vmem_to_hbm [thread:$0]  %s638, 16, %s640, [#allocation5]
    $region45: #{tpu_custom_call.1} parent=1 // pred_fallthru
      _
    // Predicated region
    $region46: #{tpu_custom_call.1} parent=1 // pred_check
      _
    $region47: #{tpu_custom_call.1} parent=1 // pred_check_branch
      %644 = sbr.rel (0) target = $region49
    $region48: #{tpu_custom_call.1} parent=1 // pred_region
      %646 = vsyncadd [#allocation8], 0
      %s648 = sshll.u32 [#allocation7], 4
      %s649 = int_to_ptr.vmem [resolvable:$true] %s648
      %s650 = sshll.u32 %s11, 4
      %s651 = int_to_ptr.hbm [resolvable:$true] %s650
      %653 = dma.vmem_to_hbm [thread:$0]  %s649, 16, %s651, [#allocation8]
    $region49: #{tpu_custom_call.1} parent=1 // pred_fallthru
      _
    // Predicated region
    $region50: #{tpu_custom_call.1} parent=1 // pred_check
      _
    $region51: #{tpu_custom_call.1} parent=1 // pred_check_branch
      %655 = sbr.rel (0) target = $region53
    $region52: #{tpu_custom_call.1} parent=1 // pred_region
      %657 = dma.done [#allocation3], 128
    $region53: #{tpu_custom_call.1} parent=1 // pred_fallthru
      _
    // Predicated region
    $region54: #{tpu_custom_call.1} parent=1 // pred_check
      _
    $region55: #{tpu_custom_call.1} parent=1 // pred_check_branch
      %659 = sbr.rel (0) target = $region57
    $region56: #{tpu_custom_call.1} parent=1 // pred_region
      %661 = dma.done [#allocation5], 16
    $region57: #{tpu_custom_call.1} parent=1 // pred_fallthru
      _
    // Predicated region
    $region58: #{tpu_custom_call.1} parent=1 // pred_check
      _
    $region59: #{tpu_custom_call.1} parent=1 // pred_check_branch
      %663 = sbr.rel (0) target = $region61
    $region60: #{tpu_custom_call.1} parent=1 // pred_region
      %665 = dma.done [#allocation5], 16
    $region61: #{tpu_custom_call.1} parent=1 // pred_fallthru
      _
    // Predicated region
    $region62: #{tpu_custom_call.1} parent=1 // pred_check
      _
    $region63: #{tpu_custom_call.1} parent=1 // pred_check_branch
      %667 = sbr.rel (0) target = $region65
    $region64: #{tpu_custom_call.1} parent=1 // pred_region
      %669 = dma.done [#allocation8], 16
    $region65: #{tpu_custom_call.1} parent=1 // pred_fallthru
      _
    %670 = vsyncpa [#allocation3], 1
    %671 = vsyncpa [#allocation5], 1
    %672 = vsyncpa [#allocation8], 1

</llo_original>
